<compile_context>
chip_gen: v5e
topology: v5e:2x2
jax: 0.10.0
libtpu: 0.0.40
codegen_flags: <defaults>
</compile_context>

<pallas_src>
import jax
import jax.numpy as jnp
from jax import lax
from jax.experimental import pallas as pl
from jax.experimental.pallas import tpu as pltpu


def _round_up(x, m):
    return ((x + m - 1) // m) * m


def _sublane(dtype):
    # Sublane packing: f32 -> 8, bf16/f16 -> 16, int8/fp8 -> 32.
    return max(8, 32 // jnp.dtype(dtype).itemsize)


def _pick_tile(dim, align, cap):
    """Pick (tile, padded_dim) for an axis of length `dim`.

    Full-extent (possibly unaligned) block whenever dim <= cap: zero padding,
    legal per the "(8,128)-divisible or equal to full dim" rule. Otherwise the
    aligned tile <= cap minimizing total padding (ties -> largest tile)."""
    if dim <= cap:
        return dim, dim
    best_t, best_pad = align, _round_up(dim, align)
    for t in range(align, cap + 1, align):
        padded = _round_up(dim, t)
        if padded < best_pad or (padded == best_pad and t > best_t):
            best_t, best_pad = t, padded
    return best_t, best_pad


def _linear_bias_kernel(x_ref, w_ref, b_ref, o_ref, acc_ref):
    """One (tm, tn) output tile; K is the innermost (arbitrary) grid axis."""
    k = pl.program_id(2)

    @pl.when(k == 0)
    def _():
        acc_ref[...] = jnp.zeros_like(acc_ref)

    # (tm, tk) x (tk, tn) -> NN contraction, no in-kernel weight transpose.
    acc_ref[...] += jnp.dot(x_ref[...], w_ref[...],
                            preferred_element_type=jnp.float32)

    @pl.when(k == pl.num_programs(2) - 1)
    def _():
        o_ref[...] = (acc_ref[...]
                      + b_ref[...].astype(jnp.float32)).astype(o_ref.dtype)


def _linear_nobias_kernel(x_ref, w_ref, o_ref, acc_ref):
    k = pl.program_id(2)

    @pl.when(k == 0)
    def _():
        acc_ref[...] = jnp.zeros_like(acc_ref)

    acc_ref[...] += jnp.dot(x_ref[...], w_ref[...],
                            preferred_element_type=jnp.float32)

    @pl.when(k == pl.num_programs(2) - 1)
    def _():
        o_ref[...] = acc_ref[...].astype(o_ref.dtype)


def prepare_weight(weight):
    """One-time conversion of a PyTorch-layout (out_dim, in_dim) weight into the
    (in_dim, out_dim) layout the kernel consumes. Call once at init / cache it,
    not once per forward call."""
    return jnp.asarray(weight).T


def linear_norm_forward(x, weight_t, bias=None, *, compute_dtype=None,
                        max_tm=512, max_tn=1024, max_tk=1024,
                        force_pallas=False):
    """y = x @ weight_t + bias over the last axis of x.

    x:        (..., in_dim)
    weight_t: (in_dim, out_dim)   -- pre-transposed, see prepare_weight()
    bias:     (out_dim,) or None
    compute_dtype: optional operand dtype (e.g. jnp.bfloat16); accumulation is
        always f32, output dtype matches x.dtype.
    """
    in_dim, out_dim = int(weight_t.shape[0]), int(weight_t.shape[1])
    assert x.shape[-1] == in_dim
    lead_shape = x.shape[:-1]
    m = 1
    for d in lead_shape:
        m *= int(d)

    # Small-problem fallback: below ~one MXU-tile of work, pallas_call setup,
    # padding and the grid prologue dominate -> let XLA fuse it.
    if not force_pallas and m * in_dim * out_dim < (1 << 21):
        y = jnp.einsum("...k,kn->...n", x, weight_t,
                       precision=lax.Precision.HIGHEST)
        if bias is not None:
            y = y + bias
        return y

    has_bias = bias is not None
    cd = jnp.dtype(compute_dtype) if compute_dtype is not None else jnp.dtype(x.dtype)
    itemsize = cd.itemsize
    align_m = _sublane(cd)

    tm, mp = _pick_tile(m, align_m, max_tm)
    tn, np_ = _pick_tile(out_dim, 128, max_tn)
    tk, kp = _pick_tile(in_dim, 128, max_tk)

    # Megacore (v7x: 2 TCs/chip): make sure the parallel (M, N) grid has >= 2
    # blocks for non-tiny problems so both cores get work.
    if (mp // tm) * (np_ // tn) == 1 and m >= 256:
        tm = _round_up(-(-m // 2), align_m)
        mp = _round_up(m, tm)

    x2d = x.reshape(m, in_dim).astype(cd)
    if (mp, kp) != (m, in_dim):
        x2d = jnp.pad(x2d, ((0, mp - m), (0, kp - in_dim)))
    w = weight_t.astype(cd)
    if (kp, np_) != (in_dim, out_dim):
        # Rare: only when a dim exceeds its tile cap with no clean 128-multiple
        # divisor; _pick_tile already minimizes this padding.
        w = jnp.pad(w, ((0, kp - in_dim), (0, np_ - out_dim)))

    grid = (mp // tm, np_ // tn, kp // tk)

    in_specs = [
        pl.BlockSpec((tm, tk), lambda i, j, k: (i, k)),   # x
        pl.BlockSpec((tk, tn), lambda i, j, k: (k, j)),   # weight (in, out)
    ]
    operands = [x2d, w]
    if has_bias:
        b2d = bias.reshape(1, out_dim)
        if np_ != out_dim:
            b2d = jnp.pad(b2d, ((0, 0), (0, np_ - out_dim)))
        in_specs.append(pl.BlockSpec((1, tn), lambda i, j, k: (0, j)))
        operands.append(b2d)

    kernel = _linear_bias_kernel if has_bias else _linear_nobias_kernel

    # Per-step double-buffered VMEM footprint -> explicit scoped-VMEM limit.
    # (v5e default is only 16 MiB; keep well under v7x's 64 MiB per-TC VMEM.)
    buf_bytes = 2 * (tm * tk + tk * tn + tm * tn) * itemsize + tm * tn * 4
    if has_bias:
        buf_bytes += 2 * tn * jnp.dtype(b2d.dtype).itemsize
    vmem_limit = int(min(48 * 2 ** 20, max(32 * 2 ** 20, buf_bytes * 3 // 2)))

    cost = pl.CostEstimate(
        flops=2 * m * out_dim * in_dim,
        transcendentals=0,
        bytes_accessed=(x2d.size * itemsize + w.size * itemsize
                        + mp * np_ * jnp.dtype(x.dtype).itemsize))

    out = pl.pallas_call(
        kernel,
        out_shape=jax.ShapeDtypeStruct((mp, np_), x.dtype),
        grid_spec=pltpu.PrefetchScalarGridSpec(
            num_scalar_prefetch=0,
            grid=grid,
            in_specs=in_specs,
            out_specs=pl.BlockSpec((tm, tn), lambda i, j, k: (i, j)),
            scratch_shapes=[pltpu.VMEM((tm, tn), jnp.float32)],
        ),
        compiler_params=pltpu.CompilerParams(
            dimension_semantics=("parallel", "parallel", "arbitrary"),
            vmem_limit_bytes=vmem_limit),
        cost_estimate=cost,
    )(*operands)

    if (mp, np_) != (m, out_dim):
        out = out[:m, :out_dim]
    return out.reshape(*lead_shape, out_dim)


_GAINS = {
    "linear": 1.0, "identity": 1.0, "sigmoid": 1.0,
    "conv1d": 1.0, "conv2d": 1.0, "conv3d": 1.0,
    "tanh": 5.0 / 3.0, "relu": 2.0 ** 0.5,
}


def init_linear_norm_params(key, in_dim, out_dim, w_init_gain="linear",
                            dtype=jnp.float32):
    """xavier_uniform_ weight (PyTorch (out_dim, in_dim) layout) + default bias init."""
    gain = _GAINS[w_init_gain]
    bound = gain * (6.0 / (in_dim + out_dim)) ** 0.5
    wkey, bkey = jax.random.split(key)
    weight = jax.random.uniform(
        wkey, (out_dim, in_dim), dtype=dtype, minval=-bound, maxval=bound)
    # PyTorch nn.Linear default bias init: U(-1/sqrt(fan_in), 1/sqrt(fan_in))
    b_bound = 1.0 / (in_dim ** 0.5)
    bias = jax.random.uniform(
        bkey, (out_dim,), dtype=dtype, minval=-b_bound, maxval=b_bound)
    return weight, bias


def _reference(x, weight, bias=None):
    y = jnp.einsum("...k,nk->...n", x, weight, precision=lax.Precision.HIGHEST)
    if bias is not None:
        y = y + bias
    return y


if __name__ == "__main__":
    key = jax.random.PRNGKey(0)
    k1, k2, k3, k4 = jax.random.split(key, 4)

    # Small shape consistent with the module's typical use (batch, seq, feat).
    batch, seq, in_dim, out_dim = 2, 8, 32, 32
    x = jax.random.normal(k1, (batch, seq, in_dim), dtype=jnp.float32)
    weight, bias = init_linear_norm_params(k2, in_dim, out_dim)
    w_t = prepare_weight(weight)   # one-time (in_dim, out_dim) layout

    y_ref = _reference(x, weight, bias)

    # (a) default path: small problems take the einsum fallback.
    y_fb = jax.block_until_ready(linear_norm_forward(x, w_t, bias))
    assert y_fb.shape == (batch, seq, out_dim)
    assert jnp.allclose(y_fb, y_ref, atol=1e-4, rtol=1e-4)

    # (b) Pallas single-tile path (bias and no-bias kernels).
    y_pl = jax.block_until_ready(
        linear_norm_forward(x, w_t, bias, force_pallas=True))
    assert jnp.allclose(y_pl, y_ref, atol=1e-4, rtol=1e-4)
    y_nb = jax.block_until_ready(
        linear_norm_forward(x, w_t, None, force_pallas=True))
    assert jnp.allclose(y_nb, _reference(x, weight, None), atol=1e-4, rtol=1e-4)

    # (c) Multi-tile path: divisor-friendly tiles (tm=320, tn=768 full,
    #     tk=640 full -> zero padding, weight resident in VMEM, M split over
    #     two parallel blocks), K-accumulation epilogue with bias.
    b2, s2, in2, out2 = 4, 160, 640, 768
    x_big = jax.random.normal(k3, (b2, s2, in2), dtype=jnp.float32)
    w_big, b_big = init_linear_norm_params(k4, in2, out2, w_init_gain="relu")
    w_big_t = prepare_weight(w_big)
    y_big = jax.block_until_ready(linear_norm_forward(x_big, w_big_t, b_big))
    y_big_ref = _reference(x_big, w_big, b_big)
    assert y_big.shape == (b2, s2, out2)
    assert jnp.allclose(y_big, y_big_ref, atol=2e-3, rtol=2e-3)

    # (d) Optional bf16 operand path (f32 accumulation, f32 output).
    y_bf16 = jax.block_until_ready(
        linear_norm_forward(x_big, w_big_t, b_big, compute_dtype=jnp.bfloat16))
    assert y_bf16.dtype == jnp.float32
    assert jnp.allclose(y_bf16, y_big_ref, atol=5e-2, rtol=5e-2)

    print("KERNEL_OK")
</pallas_src>

<mosaic_0001>
module attributes {stable_mosaic.version = 11 : i64} {
  func.func @_linear_bias_kernel(%arg0: i32, %arg1: i32, %arg2: i32, %arg3: memref<16x32xf32, #tpu.memory_space<vmem>>, %arg4: memref<32x32xf32, #tpu.memory_space<vmem>>, %arg5: memref<1x32xf32, #tpu.memory_space<vmem>>, %arg6: memref<16x32xf32, #tpu.memory_space<vmem>>, %arg7: memref<16x32xf32, #tpu.memory_space<vmem>>) attributes {dimension_semantics = [#tpu.dimension_semantics<parallel>, #tpu.dimension_semantics<parallel>, #tpu.dimension_semantics<arbitrary>], iteration_bounds = array<i64: 1, 1, 1>, scalar_prefetch = 0 : i64, scratch_operands = 1 : i64, tpu.core_type = #tpu.core_type<tc>, window_params = [{transform_indices = @transform_0, window_bounds = array<i64: 16, 32>}, {transform_indices = @transform_1, window_bounds = array<i64: 32, 32>}, {transform_indices = @transform_2, window_bounds = array<i64: 1, 32>}, {transform_indices = @transform_3, window_bounds = array<i64: 16, 32>}]} {
    %c0_i32 = arith.constant 0 : i32
    %0 = arith.cmpi eq, %arg2, %c0_i32 : i32
    %1 = arith.extui %0 : i1 to i32
    %c0_i32_0 = arith.constant 0 : i32
    %2 = arith.cmpi ne, %1, %c0_i32_0 : i32
    scf.if %2 {
      %cst_10 = arith.constant 0.000000e+00 : f32
      %12 = vector.broadcast %cst_10 : f32 to vector<16x32xf32>
      %c0_11 = arith.constant 0 : index
      %c0_12 = arith.constant 0 : index
      %13 = vector.load %arg7[%c0_11, %c0_12] : memref<16x32xf32, #tpu.memory_space<vmem>>, vector<16x32xf32>
      tpu.vector_store %arg7[%c0_11, %c0_12], %12 {strides = array<i32>} : memref<16x32xf32, #tpu.memory_space<vmem>>, vector<16x32xf32>,
    } else {
    }
    %c0 = arith.constant 0 : index
    %c0_1 = arith.constant 0 : index
    %3 = vector.load %arg7[%c0, %c0_1] : memref<16x32xf32, #tpu.memory_space<vmem>>, vector<16x32xf32>
    %c0_2 = arith.constant 0 : index
    %c0_3 = arith.constant 0 : index
    %4 = vector.load %arg3[%c0_2, %c0_3] : memref<16x32xf32, #tpu.memory_space<vmem>>, vector<16x32xf32>
    %c0_4 = arith.constant 0 : index
    %c0_5 = arith.constant 0 : index
    %5 = vector.load %arg4[%c0_4, %c0_5] : memref<32x32xf32, #tpu.memory_space<vmem>>, vector<32x32xf32>
    %cst = arith.constant dense<0.000000e+00> : vector<16x32xf32>
    %6 = tpu.matmul %4, %5, %cst {dimension_numbers = #tpu.dot_dimension_numbers<[1], [0], [0], [1], [0, 0, 1, 1], [], []>} : vector<16x32xf32>, vector<32x32xf32>, vector<16x32xf32> -> vector<16x32xf32>
    %7 = arith.addf %3, %6 : vector<16x32xf32>
    %c0_6 = arith.constant 0 : index
    %c0_7 = arith.constant 0 : index
    %8 = vector.load %arg7[%c0_6, %c0_7] : memref<16x32xf32, #tpu.memory_space<vmem>>, vector<16x32xf32>
    tpu.vector_store %arg7[%c0_6, %c0_7], %7 {strides = array<i32>} : memref<16x32xf32, #tpu.memory_space<vmem>>, vector<16x32xf32>,
    %c0_i32_8 = arith.constant 0 : i32
    %9 = arith.cmpi eq, %arg2, %c0_i32_8 : i32
    %10 = arith.extui %9 : i1 to i32
    %c0_i32_9 = arith.constant 0 : i32
    %11 = arith.cmpi ne, %10, %c0_i32_9 : i32
    scf.if %11 {
      %c0_10 = arith.constant 0 : index
      %c0_11 = arith.constant 0 : index
      %12 = vector.load %arg7[%c0_10, %c0_11] : memref<16x32xf32, #tpu.memory_space<vmem>>, vector<16x32xf32>
      %c0_12 = arith.constant 0 : index
      %c0_13 = arith.constant 0 : index
      %13 = vector.load %arg5[%c0_12, %c0_13] : memref<1x32xf32, #tpu.memory_space<vmem>>, vector<1x32xf32>
      %14 = vector.broadcast %13 : vector<1x32xf32> to vector<16x32xf32>
      %15 = arith.addf %12, %14 : vector<16x32xf32>
      %c0_14 = arith.constant 0 : index
      %c0_15 = arith.constant 0 : index
      %16 = vector.load %arg6[%c0_14, %c0_15] : memref<16x32xf32, #tpu.memory_space<vmem>>, vector<16x32xf32>
      tpu.vector_store %arg6[%c0_14, %c0_15], %15 {strides = array<i32>} : memref<16x32xf32, #tpu.memory_space<vmem>>, vector<16x32xf32>,
    } else {
    }
    return
  }
  func.func @transform_0(%arg0: i32, %arg1: i32, %arg2: i32) -> (i32, i32) {
    %c0_i32 = arith.constant 0 : i32
    return %arg0, %arg2 : i32, i32
  }
  func.func @transform_1(%arg0: i32, %arg1: i32, %arg2: i32) -> (i32, i32) {
    %c0_i32 = arith.constant 0 : i32
    return %arg2, %arg1 : i32, i32
  }
  func.func @transform_2(%arg0: i32, %arg1: i32, %arg2: i32) -> (i32, i32) {
    %c0_i32 = arith.constant 0 : i32
    %c0_i32_0 = arith.constant 0 : i32
    return %c0_i32, %arg1 : i32, i32
  }
  func.func @transform_3(%arg0: i32, %arg1: i32, %arg2: i32) -> (i32, i32) {
    %c0_i32 = arith.constant 0 : i32
    return %arg0, %arg1 : i32, i32
  }
}

</mosaic_0001>

<llo_original>
// kernel: tpu_custom_call.1
$region0: #{tpu_custom_call.1}
  #allocation0 [shape = 'u32[]', space=smem, size = 0x4, offset = 0x4, fixed_abs, tag = 'smem constant byte address 0x4 - core index']
  #allocation1 [shape = 'u32[72,128]{1,0:T(1,128)}', space=vmem, size = 0x9000, scoped, tag = 'internal scratch']
  #allocation2 [shape = 'f32[16,32]{1,0:T(8,128)}', space=vmem, size = 0x2000, scoped, tag = 'scratch operand']
  %s0 = inlined_call_operand.hbm [shape: f32[16,32], index: 0, kind: input, shape index: {}]
  %s1 = inlined_call_operand.hbm [shape: f32[32,32], index: 1, kind: input, shape index: {}]
  %s2 = inlined_call_operand.vmem [shape: f32[1,32], index: 2, kind: input, shape index: {}]
  %s3 = inlined_call_operand.hbm [shape: f32[16,32], index: 3, kind: output, shape index: {}]
  %s4 = sld [smem:[#allocation0]]
  $region38: #{tpu_custom_call.1} parent=0
    _
  %s6 = ssub.s32 1, %s4
  %s7 = scalar_select 0, %s6, %s4
  $region1: #{tpu_custom_call.1} parent=0
    #allocation3 [shape = 'u8[8192]{0}', space=vmem, size = 0x2000, scoped, tag = 'input window, operand 0, single buffered']
    #allocation4 [shape = 's32[1]{0}', space=sflag, size = 0x4, scoped, tag = 'scoped memory for tpu_custom_call.1']
    #allocation5 [shape = 's32[1]{0}', space=sflag, size = 0x4, scoped, tag = 'scoped memory for tpu_custom_call.1']
    #allocation6 [shape = 'u8[16384]{0}', space=vmem, size = 0x4000, scoped, tag = 'input window, operand 1, single buffered']
    #allocation7 [shape = 's32[1]{0}', space=sflag, size = 0x4, scoped, tag = 'scoped memory for tpu_custom_call.1']
    #allocation8 [shape = 'u8[8192]{0}', space=vmem, size = 0x2000, scoped, tag = 'output window, operand 0, single buffered']
    %8 = vsyncpa [#allocation4], 0
    %9 = vsyncpa [#allocation7], 0
    %10 = vsyncpa [#allocation5], 0
    // Predicated region
    $region2: #{tpu_custom_call.1} parent=1 // pred_check
      _
    $region3: #{tpu_custom_call.1} parent=1 // pred_check_branch
      %12 = sbr.rel (0) target = $region5
    $region4: #{tpu_custom_call.1} parent=1 // pred_region
      %14 = vsyncadd [#allocation4], 0
      %s15 = sshll.u32 %s0, 4
      %s16 = int_to_ptr.hbm [resolvable:$true] %s15
      %s17 = sshll.u32 [#allocation3], 4
      %s18 = int_to_ptr.vmem [resolvable:$true] %s17
      %23 = dma.hbm_to_vmem [thread:$0]  %s16, 256, %s18, [#allocation4], 128, 128, 8
    $region5: #{tpu_custom_call.1} parent=1 // pred_fallthru
      _
    // Predicated region
    $region6: #{tpu_custom_call.1} parent=1 // pred_check
      _
    $region7: #{tpu_custom_call.1} parent=1 // pred_check_branch
      %25 = sbr.rel (0) target = $region9
    $region8: #{tpu_custom_call.1} parent=1 // pred_region
      %27 = vsyncadd [#allocation7], 0
      %s28 = sshll.u32 %s1, 4
      %s29 = int_to_ptr.hbm [resolvable:$true] %s28
      %s30 = sshll.u32 [#allocation6], 4
      %s31 = int_to_ptr.vmem [resolvable:$true] %s30
      %36 = dma.hbm_to_vmem [thread:$0]  %s29, 512, %s31, [#allocation7], 128, 128, 8
    $region9: #{tpu_custom_call.1} parent=1 // pred_fallthru
      _
    // Predicated region
    $region10: #{tpu_custom_call.1} parent=1 // pred_check
      _
    $region11: #{tpu_custom_call.1} parent=1 // pred_check_branch
      %38 = sbr.rel (0) target = $region13
    $region12: #{tpu_custom_call.1} parent=1 // pred_region
      _
    $region13: #{tpu_custom_call.1} parent=1 // pred_fallthru
      _
    // Predicated region
    $region14: #{tpu_custom_call.1} parent=1 // pred_check
      _
    $region15: #{tpu_custom_call.1} parent=1 // pred_check_branch
      %40 = sbr.rel (0) target = $region17
    $region16: #{tpu_custom_call.1} parent=1 // pred_region
      %42 = dma.done [#allocation4], 256
    $region17: #{tpu_custom_call.1} parent=1 // pred_fallthru
      _
    // Predicated region
    $region18: #{tpu_custom_call.1} parent=1 // pred_check
      _
    $region19: #{tpu_custom_call.1} parent=1 // pred_check_branch
      %44 = sbr.rel (0) target = $region21
    $region20: #{tpu_custom_call.1} parent=1 // pred_region
      %46 = dma.done [#allocation7], 512
    $region21: #{tpu_custom_call.1} parent=1 // pred_fallthru
      _
    %p47 = scmp.eq.s32.totalorder 0, 0
    // Predicated region
    $region22: #{tpu_custom_call.1} parent=1 // pred_check
      %p48 = pneg %p47
    $region23: #{tpu_custom_call.1} parent=1 // pred_check_branch
      %50 = sbr.rel (%p48) target = $region25
    $region24: #{tpu_custom_call.1} parent=1 // pred_region
      %vm51 = vcmask 261120
      %52 = vst.msk [vmem:[#allocation2] sm:$0xff] %vm51, 0.0
      %53 = vst.msk [vmem:[#allocation2 + $0x8] sm:$0xff] %vm51, 0.0
    $region25: #{tpu_custom_call.1} parent=1 // pred_fallthru
      _
    %v54 = vld [vmem:[#allocation2] sm:$0xff]
    %v55 = vld [vmem:[#allocation2 + $0x8] sm:$0xff]
    %v56 = vld [vmem:[#allocation3] sm:$0xff]
    %v57 = vld [vmem:[#allocation3 + $0x8] sm:$0xff]
    %v58 = vld [vmem:[#allocation6] sm:$0xff]
    %v59 = vld [vmem:[#allocation6 + $0x8] sm:$0xff]
    %v60 = vld [vmem:[#allocation6 + $0x10] sm:$0xff]
    %v61 = vld [vmem:[#allocation6 + $0x18] sm:$0xff]
    %vm62 = vcmask 261120
    %v64 = vsel %vm62, %v56, 0
    %v67 = vsel %vm62, %v57, 0
    %69 = vmatpush.msra.mxu0 0.0
    %70 = vmatpush.msra.mxu0 0.0
    %71 = vmatpush.msra.mxu0 0.0
    %72 = vmatpush.msra.mxu0 0.0
    %73 = vmatpush.msra.mxu0 0.0
    %74 = vmatpush.msra.mxu0 0.0
    %75 = vmatpush.msra.mxu0 0.0
    %76 = vmatpush.msra.mxu0 0.0
    %77 = vmatpush.msra.mxu0 0.0
    %78 = vmatpush.msra.mxu0 0.0
    %79 = vmatpush.msra.mxu0 0.0
    %80 = vmatpush.msra.mxu0 0.0
    %81 = vmatpush.msra.mxu0 %v61
    %82 = vmatpush.msra.mxu0 %v60
    %83 = vmatpush.msra.mxu0 %v59
    %84 = vmatpush.msra.mxu0 %v58
    %85 = vmatmul.f32.gmra.mxu0 %v64
    %v86 = vpop.f32.mrf.mxu0
    %v87 = vadd.f32 0.0, %v86
    %88 = vmatmul.f32.gmra.mxu0 %v67
    %v89 = vpop.f32.mrf.mxu0
    %v90 = vadd.f32 0.0, %v89
    %91 = vdwg.mxu0
    %v92 = vadd.f32 %v54, %v87
    %v93 = vadd.f32 %v55, %v90
    %94 = vst.msk [vmem:[#allocation2] sm:$0xff] %vm62, %v92
    %95 = vst.msk [vmem:[#allocation2 + $0x8] sm:$0xff] %vm62, %v93
    // Predicated region
    $region26: #{tpu_custom_call.1} parent=1 // pred_check
      %p96 = pneg %p47
    $region27: #{tpu_custom_call.1} parent=1 // pred_check_branch
      %98 = sbr.rel (%p96) target = $region29
    $region28: #{tpu_custom_call.1} parent=1 // pred_region
      %v99 = vld [vmem:[#allocation2] sm:$0xff]
      %v100 = vld [vmem:[#allocation2 + $0x8] sm:$0xff]
      %v101 = vld [vmem:[%s2] sm:$0x1]
      %v103 = vperm.slane %v101, 0
      %v105 = vadd.f32 %v99, %v103
      %v106 = vadd.f32 %v100, %v103
      %107 = vst.msk [vmem:[#allocation8] sm:$0xff] %vm62, %v105
      %108 = vst.msk [vmem:[#allocation8 + $0x8] sm:$0xff] %vm62, %v106
    $region29: #{tpu_custom_call.1} parent=1 // pred_fallthru
      _
    // Predicated region
    $region30: #{tpu_custom_call.1} parent=1 // pred_check
      _
    $region31: #{tpu_custom_call.1} parent=1 // pred_check_branch
      %110 = sbr.rel (0) target = $region33
    $region32: #{tpu_custom_call.1} parent=1 // pred_region
      %112 = vsyncadd [#allocation5], 0
      %s113 = sshll.u32 [#allocation8], 4
      %s114 = int_to_ptr.vmem [resolvable:$true] %s113
      %s115 = sshll.u32 %s3, 4
      %s116 = int_to_ptr.hbm [resolvable:$true] %s115
      %121 = dma.vmem_to_hbm [thread:$0]  %s114, 256, %s116, [#allocation5], 128, 128, 8
    $region33: #{tpu_custom_call.1} parent=1 // pred_fallthru
      _
    // Predicated region
    $region34: #{tpu_custom_call.1} parent=1 // pred_check
      _
    $region35: #{tpu_custom_call.1} parent=1 // pred_check_branch
      %123 = sbr.rel (0) target = $region37
    $region36: #{tpu_custom_call.1} parent=1 // pred_region
      %125 = dma.done [#allocation5], 256
    $region37: #{tpu_custom_call.1} parent=1 // pred_fallthru
      _
    %126 = vsyncpa [#allocation4], 1
    %127 = vsyncpa [#allocation7], 1
    %128 = vsyncpa [#allocation5], 1

</llo_original>
